<compile_context>
chip_gen: v7x
topology: tpu7x:2x2x1
jax: 0.10.0
libtpu: 0.0.40
codegen_flags: <defaults>
</compile_context>

<pallas_src>
import jax
import jax.numpy as jnp
from jax import lax
from jax.experimental import pallas as pl
from jax.experimental.pallas import tpu as pltpu


def _eca_kernel(w_ref, x_ref, o_ref):
    # w_ref: (3,) conv1d weight in SMEM
    # x_ref: (TB, C, H*W) input block (VMEM)
    # o_ref: (TB, C, H*W) output block (VMEM)

    # Scalar reads first: keep them off the vector critical path.
    w0 = w_ref[0]
    w1 = w_ref[1]
    w2 = w_ref[2]

    # --- Pooling pass: global average pool over spatial (lane) axis, f32 acc.
    pooled = jnp.mean(x_ref[...], axis=-1, dtype=jnp.float32)  # (TB, C)
    C = pooled.shape[1]

    # 1D conv over the channel axis, kernel size 3, zero padding 1:
    #   y[c] = w0 * p[c-1] + w1 * p[c] + w2 * p[c+1]
    idx = lax.broadcasted_iota(jnp.int32, pooled.shape, 1)          # (TB, C)
    left = jnp.where(idx > 0, pltpu.roll(pooled, shift=1, axis=1), 0.0)
    right = jnp.where(idx < C - 1, pltpu.roll(pooled, shift=C - 1, axis=1), 0.0)

    y = jax.nn.sigmoid(w0 * left + w1 * pooled + w2 * right)        # (TB, C) f32
    y = y.astype(o_ref.dtype)

    # --- Scaling pass: re-read VMEM (keeps vreg pressure low) and multiply
    # in the input dtype; no full-block f32 promotion.
    o_ref[...] = x_ref[...] * y[:, :, None]


def _pick_batch_tile(B, C, HW, itemsize, vmem_budget_bytes):
    """Largest divisor of B whose double-buffered in+out block fits the budget,
    capped so there are >= 2 grid steps when B >= 2 (v7x has 2 TensorCores)."""
    per_batch = C * HW * itemsize
    max_tb = max(1, vmem_budget_bytes // (4 * per_batch))  # in+out, 2 buffers each
    if B >= 2:
        max_tb = min(max_tb, max(1, B // 2))
    tb = 1
    for d in range(1, B + 1):
        if B % d == 0 and d <= max_tb:
            tb = d
    return tb


def eca_layer_pallas(x, conv_weight, *, vmem_budget_bytes=40 * 1024 * 1024):
    """x: (B, C, H, W); conv_weight: (1, 1, 3) as in nn.Conv1d(1, 1, 3)."""
    B, C, H, W = x.shape
    HW = H * W
    itemsize = jnp.dtype(x.dtype).itemsize

    # Free bitcast on contiguous NCHW: make the last dim lane-dense.
    x2 = x.reshape(B, C, HW)
    w1d = conv_weight.reshape(3).astype(jnp.float32)

    tb = _pick_batch_tile(B, C, HW, itemsize, vmem_budget_bytes)
    grid = (B // tb,)

    cost = pl.CostEstimate(
        flops=3 * B * C * HW,            # pool-sum + scale, roughly
        transcendentals=B * C,           # sigmoid per channel
        bytes_accessed=2 * B * C * HW * itemsize,
    )

    grid_spec = pltpu.PrefetchScalarGridSpec(
        num_scalar_prefetch=0,
        grid=grid,
        in_specs=[
            pl.BlockSpec(memory_space=pltpu.SMEM),                  # conv weight (3,)
            pl.BlockSpec((tb, C, HW), lambda b: (b, 0, 0)),         # x batch tile
        ],
        out_specs=pl.BlockSpec((tb, C, HW), lambda b: (b, 0, 0)),
    )

    out = pl.pallas_call(
        _eca_kernel,
        out_shape=jax.ShapeDtypeStruct((B, C, HW), x.dtype),
        grid_spec=grid_spec,
        compiler_params=pltpu.CompilerParams(
            dimension_semantics=("parallel",),
            # Above default scoped limit on v5e (16 MiB) / v6e (32 MiB), and
            # safely below v7x's 64 MiB physical VMEM.
            vmem_limit_bytes=48 * 1024 * 1024,
        ),
        cost_estimate=cost,
    )(w1d, x2)

    return out.reshape(B, C, H, W)


def eca_layer_ref(x, conv_weight):
    """Pure-JAX reference matching the PyTorch forward."""
    B, C, H, W = x.shape
    w = conv_weight.reshape(3)
    pooled = jnp.mean(x, axis=(2, 3))                                  # (B, C)
    p_pad = jnp.pad(pooled, ((0, 0), (1, 1)))                          # (B, C+2)
    y = (w[0] * p_pad[:, 0:C] + w[1] * p_pad[:, 1:C + 1]
         + w[2] * p_pad[:, 2:C + 2])                                   # (B, C)
    y = jax.nn.sigmoid(y)
    return x * y[:, :, None, None]


if __name__ == "__main__":
    key = jax.random.PRNGKey(0)
    kx, kw = jax.random.split(key)

    B, C, H, W = 2, 4, 16, 16
    x = jax.random.normal(kx, (B, C, H, W), dtype=jnp.float32)
    # Deterministic Conv1d(1, 1, kernel_size=3, bias=False) weight: shape (1, 1, 3)
    conv_weight = jax.random.normal(kw, (1, 1, 3), dtype=jnp.float32) * 0.5

    out = eca_layer_pallas(x, conv_weight)
    out = jax.block_until_ready(out)

    ref = eca_layer_ref(x, conv_weight)
    assert out.shape == x.shape
    assert jnp.allclose(out, ref, atol=1e-5, rtol=1e-5), "mismatch vs reference"

    print("KERNEL_OK")
</pallas_src>

<mosaic_0001>
module attributes {stable_mosaic.version = 11 : i64} {
  func.func @_eca_kernel(%arg0: i32, %arg1: memref<3xf32, #tpu.memory_space<smem>>, %arg2: memref<1x4x256xf32, #tpu.memory_space<vmem>>, %arg3: memref<1x4x256xf32, #tpu.memory_space<vmem>>) attributes {dimension_semantics = [#tpu.dimension_semantics<parallel>], iteration_bounds = array<i64: 2>, scalar_prefetch = 0 : i64, scratch_operands = 0 : i64, tpu.core_type = #tpu.core_type<tc>, window_params = [{transform_indices = @transform_0, window_bounds = array<i64: 3>}, {transform_indices = @transform_1, window_bounds = array<i64: 1, 4, 256>}, {transform_indices = @transform_2, window_bounds = array<i64: 1, 4, 256>}]} {
    %c0 = arith.constant 0 : index
    %0 = memref.load %arg1[%c0] : memref<3xf32, #tpu.memory_space<smem>>
    %c1 = arith.constant 1 : index
    %1 = memref.load %arg1[%c1] : memref<3xf32, #tpu.memory_space<smem>>
    %c2 = arith.constant 2 : index
    %2 = memref.load %arg1[%c2] : memref<3xf32, #tpu.memory_space<smem>>
    %c0_0 = arith.constant 0 : index
    %c0_1 = arith.constant 0 : index
    %c0_2 = arith.constant 0 : index
    %3 = vector.load %arg2[%c0_0, %c0_1, %c0_2] : memref<1x4x256xf32, #tpu.memory_space<vmem>>, vector<1x4x256xf32>
    %cst = arith.constant dense<0.000000e+00> : vector<1x4xf32>
    %4 = vector.multi_reduction <add>, %3, %cst [2] : vector<1x4x256xf32> to vector<1x4xf32>
    %cst_3 = arith.constant 2.560000e+02 : f32
    %5 = vector.broadcast %cst_3 : f32 to vector<1x4xf32>
    %6 = arith.divf %4, %5 : vector<1x4xf32>
    %7 = tpu.iota {dimensions = array<i32: 1>} : vector<1x4xi32>
    %c0_i32 = arith.constant 0 : i32
    %8 = vector.broadcast %c0_i32 : i32 to vector<1x4xi32>
    %9 = arith.cmpi sgt, %7, %8 : vector<1x4xi32>
    %c1_i32 = arith.constant 1 : i32
    %10 = tpu.dynamic_rotate %6 by %c1_i32 dim 1 : vector<1x4xf32>, i32 -> vector<1x4xf32>
    %cst_4 = arith.constant 0.000000e+00 : f32
    %11 = vector.broadcast %cst_4 : f32 to vector<1x4xf32>
    %12 = arith.select %9, %10, %11 : vector<1x4xi1>, vector<1x4xf32>
    %c3_i32 = arith.constant 3 : i32
    %13 = vector.broadcast %c3_i32 : i32 to vector<1x4xi32>
    %14 = arith.cmpi slt, %7, %13 : vector<1x4xi32>
    %c3_i32_5 = arith.constant 3 : i32
    %15 = tpu.dynamic_rotate %6 by %c3_i32_5 dim 1 : vector<1x4xf32>, i32 -> vector<1x4xf32>
    %cst_6 = arith.constant 0.000000e+00 : f32
    %16 = vector.broadcast %cst_6 : f32 to vector<1x4xf32>
    %17 = arith.select %14, %15, %16 : vector<1x4xi1>, vector<1x4xf32>
    %18 = vector.broadcast %0 : f32 to vector<1x4xf32>
    %19 = arith.mulf %18, %12 : vector<1x4xf32>
    %20 = vector.broadcast %1 : f32 to vector<1x4xf32>
    %21 = arith.mulf %20, %6 : vector<1x4xf32>
    %22 = arith.addf %19, %21 : vector<1x4xf32>
    %23 = vector.broadcast %2 : f32 to vector<1x4xf32>
    %24 = arith.mulf %23, %17 : vector<1x4xf32>
    %25 = arith.addf %22, %24 : vector<1x4xf32>
    %26 = arith.negf %25 : vector<1x4xf32>
    %27 = math.exp %26 : vector<1x4xf32>
    %cst_7 = arith.constant 1.000000e+00 : f32
    %28 = vector.broadcast %cst_7 : f32 to vector<1x4xf32>
    %29 = arith.addf %28, %27 : vector<1x4xf32>
    %30 = arith.divf %28, %29 : vector<1x4xf32>
    %c0_8 = arith.constant 0 : index
    %c0_9 = arith.constant 0 : index
    %c0_10 = arith.constant 0 : index
    %31 = vector.load %arg2[%c0_8, %c0_9, %c0_10] : memref<1x4x256xf32, #tpu.memory_space<vmem>>, vector<1x4x256xf32>
    %32 = vector.shape_cast %30 : vector<1x4xf32> to vector<1x4x1xf32>
    %33 = vector.broadcast %32 : vector<1x4x1xf32> to vector<1x4x256xf32>
    %34 = arith.mulf %31, %33 : vector<1x4x256xf32>
    %c0_11 = arith.constant 0 : index
    %c0_12 = arith.constant 0 : index
    %c0_13 = arith.constant 0 : index
    %35 = vector.load %arg3[%c0_11, %c0_12, %c0_13] : memref<1x4x256xf32, #tpu.memory_space<vmem>>, vector<1x4x256xf32>
    tpu.vector_store %arg3[%c0_11, %c0_12, %c0_13], %34 {strides = array<i32>} : memref<1x4x256xf32, #tpu.memory_space<vmem>>, vector<1x4x256xf32>,
    return
  }
  func.func @transform_0(%arg0: i32) -> i32 {
    %c0_i32 = arith.constant 0 : i32
    %c0_i32_0 = arith.constant 0 : i32
    return %c0_i32 : i32
  }
  func.func @transform_1(%arg0: i32) -> (i32, i32, i32) {
    %c0_i32 = arith.constant 0 : i32
    %c0_i32_0 = arith.constant 0 : i32
    %c0_i32_1 = arith.constant 0 : i32
    return %arg0, %c0_i32, %c0_i32_0 : i32, i32, i32
  }
  func.func @transform_2(%arg0: i32) -> (i32, i32, i32) {
    %c0_i32 = arith.constant 0 : i32
    %c0_i32_0 = arith.constant 0 : i32
    %c0_i32_1 = arith.constant 0 : i32
    return %arg0, %c0_i32, %c0_i32_0 : i32, i32, i32
  }
}

</mosaic_0001>

<llo_original>
// kernel: tpu_custom_call.1
$region0: #{tpu_custom_call.1}
  #allocation0 [shape = 'u32[]', space=smem, size = 0x4, offset = 0x4, fixed_abs, tag = 'smem constant byte address 0x4 - core index']
  #allocation1 [shape = 'u32[144,128]{1,0:T(1,128)}', space=vmem, size = 0x12000, scoped, tag = 'internal scratch']
  %s0 = inlined_call_operand.hbm [shape: f32[3], index: 0, kind: input, shape index: {}]
  %s1 = inlined_call_operand.hbm [shape: f32[2,4,256], index: 1, kind: input, shape index: {}]
  %s2 = inlined_call_operand.hbm [shape: f32[2,4,256], index: 2, kind: output, shape index: {}]
  %s3 = sld [smem:[#allocation0]]
  $region49: #{tpu_custom_call.1} parent=0
    _
  %s5 = ssub.s32 1, %s3
  %s6 = scalar_select 0, %s5, %s3
  $region1: #{tpu_custom_call.1} parent=0
    #allocation2 [shape = 'u8[512]{0}', space=smem, size = 0x200, scoped, tag = 'input window, operand 0, single buffered']
    #allocation3 [shape = 's32[2]{0}', space=sflag, size = 0x8, scoped, tag = 'scoped memory for tpu_custom_call.1']
    #allocation4 [shape = 's32[2]{0}', space=sflag, size = 0x8, scoped, tag = 'scoped memory for tpu_custom_call.1']
    #allocation5 [shape = 's32[2]{0}', space=sflag, size = 0x8, scoped, tag = 'scoped memory for tpu_custom_call.1']
    #allocation6 [shape = 'u8[8192]{0}', space=vmem, size = 0x2000, scoped, tag = 'input window, operand 1']
    #allocation7 [shape = 'u8[8192]{0}', space=vmem, size = 0x2000, scoped, tag = 'output window, operand 0']
    %7 = vsyncpa [#allocation5], 0
    %8 = vsyncpa [#allocation3], 0
    %s9 = scalar_lea.sflag [#allocation3], 1
    %10 = vsyncpa %s9, 0
    %11 = vsyncpa [#allocation4], 0
    %s12 = scalar_lea.sflag [#allocation4], 1
    %13 = vsyncpa %s12, 0
    loop: start=0, step=1, limit=4
    $region2: #{tpu_custom_call.1} parent=1 // loop_pre_header
      _
    $region3: #{tpu_custom_call.1} parent=1 // loop_header
      %s15 = sphi 0, %s19
      %p16 = scmp.ge.s32.totalorder %s15, 4
      %s23 = sphi 0, %s23
      %s25 = sphi 0, %s23
      %s26 = sphi 0, %s25
      %s40 = sphi 0, %s26
      %s46 = sphi 0, %s48
      %s49 = sphi 0, %s46
      %s50 = sphi 0, %s49
      %s66 = sphi 0, %s50
      %s72 = sphi 0, %s74
      %s75 = sphi 0, %s72
      %s76 = sphi 0, %s75
      %s92 = sphi 0, %s76
    $region4: #{tpu_custom_call.1} parent=1 // loop_header_branch
      %18 = sbr.rel (%p16) target = $region8
    $region5: #{tpu_custom_call.1} parent=1 // loop_body
      %s20 = ssub.s32 %s15, 1
      %s21 = ssub.s32 %s15, 2
      %s22 = sadd.s32 %s15, 1
      %s24 = sadd.s32 %s23, 1
      %p27 = scmp.eq.s32.totalorder %s15, 1
      %p28 = scmp.ne.s32.totalorder %s23, %s25
      %p29 = scmp.eq.s32.totalorder %s15, 0
      %p30 = por %p28, %p29
      %p31 = scmp.ne.s32.totalorder %s23, %s25
      %p32 = scmp.eq.s32.totalorder %s20, 1
      %p33 = por %p31, %p32
      %p34 = scmp.ne.s32.totalorder %s25, %s26
      %p35 = scmp.eq.s32.totalorder %s20, 0
      %p36 = por %p34, %p35
      %p37 = scmp.ne.s32.totalorder %s25, %s26
      %p38 = scmp.eq.s32.totalorder %s21, 1
      %p39 = por %p37, %p38
      %p41 = scmp.ne.s32.totalorder %s26, %s40
      %p42 = scmp.eq.s32.totalorder %s21, 0
      %p43 = por %p41, %p42
      %s44 = ssub.s32 %s15, %s22
      %p45 = scmp.eq.s32.totalorder %s44, 0
      %s47 = sadd.s32 %s46, 1
      %s48 = scalar_select %p45, %s46, %s47
      %p51 = pneg %p45
      %p52 = scmp.eq.s32.totalorder %s15, 1
      %p53 = por %p51, %p52
      %p54 = scmp.ne.s32.totalorder %s46, %s49
      %p55 = scmp.eq.s32.totalorder %s15, 0
      %p56 = por %p54, %p55
      %p57 = scmp.ne.s32.totalorder %s46, %s49
      %p58 = scmp.eq.s32.totalorder %s20, 1
      %p59 = por %p57, %p58
      %p60 = scmp.ne.s32.totalorder %s49, %s50
      %p61 = scmp.eq.s32.totalorder %s20, 0
      %p62 = por %p60, %p61
      %p63 = scmp.ne.s32.totalorder %s49, %s50
      %p64 = scmp.eq.s32.totalorder %s21, 1
      %p65 = por %p63, %p64
      %p67 = scmp.ne.s32.totalorder %s50, %s66
      %p68 = scmp.eq.s32.totalorder %s21, 0
      %p69 = por %p67, %p68
      %s70 = ssub.s32 %s15, %s22
      %p71 = scmp.eq.s32.totalorder %s70, 0
      %s73 = sadd.s32 %s72, 1
      %s74 = scalar_select %p71, %s72, %s73
      %p77 = pneg %p71
      %p78 = scmp.eq.s32.totalorder %s15, 1
      %p79 = por %p77, %p78
      %p80 = scmp.ne.s32.totalorder %s72, %s75
      %p81 = scmp.eq.s32.totalorder %s15, 0
      %p82 = por %p80, %p81
      %p83 = scmp.ne.s32.totalorder %s72, %s75
      %p84 = scmp.eq.s32.totalorder %s20, 1
      %p85 = por %p83, %p84
      %p86 = scmp.ne.s32.totalorder %s75, %s76
      %p87 = scmp.eq.s32.totalorder %s20, 0
      %p88 = por %p86, %p87
      %p89 = scmp.ne.s32.totalorder %s75, %s76
      %p90 = scmp.eq.s32.totalorder %s21, 1
      %p91 = por %p89, %p90
      %p93 = scmp.ne.s32.totalorder %s76, %s92
      %p94 = scmp.eq.s32.totalorder %s21, 0
      %p95 = por %p93, %p94
      %p96 = scmp.le.s32.totalorder 1, %s15
      %p97 = scmp.lt.s32.totalorder %s15, 3
      %p98 = pnand %p96, %p97
      %p99 = pneg %p98
      // Predicated region
      $region9: #{tpu_custom_call.1} parent=5 // pred_check
        _
      $region10: #{tpu_custom_call.1} parent=5 // pred_check_branch
        %101 = sbr.rel (%p98) target = $region12
      $region11: #{tpu_custom_call.1} parent=5 // pred_region
        %s102 = ssub.s32 %s15, 1
        // Predicated region
        $region13: #{tpu_custom_call.1} parent=11 // pred_check
          %p103 = pneg %p36
        $region14: #{tpu_custom_call.1} parent=11 // pred_check_branch
          %105 = sbr.rel (%p103) target = $region16
        $region15: #{tpu_custom_call.1} parent=11 // pred_region
          %s107 = ssub.s32 16, 16
          %108 = vsyncadd [#allocation5], %s107
          %111 = dma.hbm_to_smem %s0, 16, [#allocation2], [#allocation5]
        $region16: #{tpu_custom_call.1} parent=11 // pred_fallthru
          _
      $region12: #{tpu_custom_call.1} parent=5 // pred_fallthru
        _
      %p112 = scmp.lt.s32.totalorder %s15, 2
      // Predicated region
      $region17: #{tpu_custom_call.1} parent=5 // pred_check
        %p113 = pneg %p112
      $region18: #{tpu_custom_call.1} parent=5 // pred_check_branch
        %115 = sbr.rel (%p113) target = $region20
      $region19: #{tpu_custom_call.1} parent=5 // pred_region
        // Predicated region
        $region21: #{tpu_custom_call.1} parent=19 // pred_check
          %p116 = pneg %p56
        $region22: #{tpu_custom_call.1} parent=19 // pred_check_branch
          %118 = sbr.rel (%p116) target = $region24
        $region23: #{tpu_custom_call.1} parent=19 // pred_region
          %s119 = sand.u32 %s46, 1
          %s120 = scalar_lea.sflag [#allocation3], %s119
          %s121 = sand.u32 %s46, 1
          %s122 = smul.addr %s121, 8
          %s123 = scalar_lea.vmem [#allocation6], %s122
          %s125 = ssub.s32 128, 128
          %126 = vsyncadd %s120, %s125
          %s127 = smul.addr %s15, 2
          %s128 = smul.addr %s127, 64
          %s129 = scalar_lea.hbm %s1, %s128
          %s131 = sshll.u32 %s123, 4
          %s132 = int_to_ptr.vmem [resolvable:$true] %s131
          %134 = dma.hbm_to_vmem [thread:$0]  %s129, 128, %s132, %s120
        $region24: #{tpu_custom_call.1} parent=19 // pred_fallthru
          _
      $region20: #{tpu_custom_call.1} parent=5 // pred_fallthru
        _
      %p135 = scmp.le.s32.totalorder 1, %s15
      %p136 = scmp.lt.s32.totalorder %s15, 3
      %p137 = pnand %p135, %p136
      %p138 = pneg %p137
      // Predicated region
      $region25: #{tpu_custom_call.1} parent=5 // pred_check
        _
      $region26: #{tpu_custom_call.1} parent=5 // pred_check_branch
        %140 = sbr.rel (%p137) target = $region28
      $region27: #{tpu_custom_call.1} parent=5 // pred_region
        %s141 = ssub.s32 %s15, 1
        // Predicated region
        $region29: #{tpu_custom_call.1} parent=27 // pred_check
          %p142 = pneg %p36
        $region30: #{tpu_custom_call.1} parent=27 // pred_check_branch
          %144 = sbr.rel (%p142) target = $region32
        $region31: #{tpu_custom_call.1} parent=27 // pred_region
          %145 = dma.done [#allocation5], 16
        $region32: #{tpu_custom_call.1} parent=27 // pred_fallthru
          _
        %s146 = sand.u32 %s49, 1
        %s147 = scalar_lea.sflag [#allocation3], %s146
        %s148 = sand.u32 %s49, 1
        %s149 = smul.addr %s148, 8
        %s150 = scalar_lea.vmem [#allocation6], %s149
        // Predicated region
        $region33: #{tpu_custom_call.1} parent=27 // pred_check
          %p151 = pneg %p62
        $region34: #{tpu_custom_call.1} parent=27 // pred_check_branch
          %153 = sbr.rel (%p151) target = $region36
        $region35: #{tpu_custom_call.1} parent=27 // pred_region
          %154 = dma.done %s147, 128
        $region36: #{tpu_custom_call.1} parent=27 // pred_fallthru
          _
        %155 = sfence
        %p156 = pneg %p36
        %p157 = pneg %p33
        %s158 = sand.u32 %s49, 1
        %s159 = scalar_lea.sflag [#allocation3], %s158
        %s160 = sand.u32 %s49, 1
        %s161 = smul.addr %s160, 8
        %s162 = scalar_lea.vmem [#allocation6], %s161
        %p163 = pneg %p62
        %p164 = pneg %p59
        %p165 = pneg %p88
        %p166 = pneg %p85
        %s167 = sand.u32 %s75, 1
        %s168 = scalar_lea.sflag [#allocation4], %s167
        %s169 = sand.u32 %s75, 1
        %s170 = smul.addr %s169, 8
        %s171 = scalar_lea.vmem [#allocation7], %s170
        %s172 = sld [smem:[#allocation2]]
        %s173 = sld [smem:[#allocation2 + $0x1]]
        %s174 = sld [smem:[#allocation2 + $0x2]]
        %v175 = vld [vmem:[%s150] sm:$0xff]
        %v177 = vcombine.high %v175, %v175
        %vm179 = vcmask 1043456
        %v180 = vsel %vm179, %v175, 0.0
        %v181 = vsel %vm179, %v177, 0.0
        %v182 = vadd.f32 %v180, %v181
        %183 = vadd.xlane.f32.xlu0 %v182
        %v184 = vpop.xlane.xlu0 %183
        %v185 = vrcp.pop 256.0
        %v186 = vmul.f32 %v184, %v185
        %v187 = vlaneseq
        %v188 = vand.u32 %v187, 127
        %vm189 = vcmp.gt.s32.totalorder %v188, 0
        %v191 = vlaneseq
        %v192 = vshrl.u32 %v191, 7
        %v193 = vsub.s32 %v188, %v192
        %v194 = vrot.slane %v186, %v193
        %vm196 = vcmask 1047584
        %197 = vrot.lane.b32.xlu0 %v194, 4
        %v198 = vpop.permute.xlu0 %197
        %v199 = vsel %vm196, %v198, %v194
        %200 = vrot.lane.b32.xlu0 %v199, 4
        %v201 = vpop.permute.xlu0 %200
        %v202 = vsel %vm196, %v201, %v194
        %204 = vrot.lane.b32.xlu0 %v202, 125
        %v205 = vpop.permute.xlu0 %204
        %v207 = vsel %vm189, %v205, 0.0
        %vm208 = vcmp.lt.s32.totalorder %v188, 3
        %209 = vrot.lane.b32.xlu0 %v202, 127
        %v210 = vpop.permute.xlu0 %209
        %v212 = vsel %vm208, %v210, 0.0
        %v213 = vstv %s172
        %v214 = vmul.f32 %v213, %v207
        %v215 = vstv %s173
        %v216 = vmul.f32 %v215, %v186
        %v218 = vlaneseq
        %v219 = vshrl.u32 %v218, 7
        %v220 = vsub.s32 %v188, %v219
        %v221 = vrot.slane %v216, %v220
        %v223 = vadd.f32 %v214, %v221
        %v224 = vstv %s174
        %v225 = vmul.f32 %v224, %v212
        %v226 = vadd.f32 %v223, %v225
        %v227 = vxor.u32 %v226, 2147483648
        %v228 = vmul.f32 %v227, 1.442695
        %v229 = vpow.pop %v228
        %v230 = vadd.f32 %v229, 1.0
        %v231 = vrcp.pop %v230
        %v232 = vmul.f32 1.0, %v231
        %v233 = vlaneseq
        %v234 = vshrl.u32 %v233, 7
        %v235 = vsub.s32 0, %v234
        %v236 = vrot.slane %v232, %v235
        %238 = vbcast.lane.b32.xlu0 %v236, 256
        %v239 = vpop.permute.xlu0 %238
        %v242 = vunpack.c.l.s4 839922192
        %v243 = vunpack.c.0.s8 %v242
        %v244 = vlaneseq
        %v245 = vshrl.u32 %v244, 7
        %v246 = vsub.s32 %v243, %v245
        %v247 = vrot.slane %v239, %v246
        %v249 = vmul.f32 %v175, %v247
        %250 = vst [vmem:[%s171] sm:$0xff] %v249
        %s251 = sand.u32 %s75, 1
        %s252 = scalar_lea.sflag [#allocation4], %s251
        %s253 = sand.u32 %s75, 1
        %s254 = smul.addr %s253, 8
        %s255 = scalar_lea.vmem [#allocation7], %s254
        // Predicated region
        $region37: #{tpu_custom_call.1} parent=27 // pred_check
          %p256 = pneg %p85
        $region38: #{tpu_custom_call.1} parent=27 // pred_check_branch
          %258 = sbr.rel (%p256) target = $region40
        $region39: #{tpu_custom_call.1} parent=27 // pred_region
          %s260 = ssub.s32 128, 128
          %261 = vsyncadd %s252, %s260
          %s262 = smul.addr %s20, 2
          %s263 = smul.addr %s262, 64
          %s264 = scalar_lea.hbm %s2, %s263
          %s266 = sshll.u32 %s255, 4
          %s267 = int_to_ptr.vmem [resolvable:$true] %s266
          %269 = dma.vmem_to_hbm [thread:$0]  %s267, 128, %s264, %s252
        $region40: #{tpu_custom_call.1} parent=27 // pred_fallthru
          _
      $region28: #{tpu_custom_call.1} parent=5 // pred_fallthru
        _
      %p270 = scmp.le.s32.totalorder 2, %s15
      // Predicated region
      $region41: #{tpu_custom_call.1} parent=5 // pred_check
        %p271 = pneg %p270
      $region42: #{tpu_custom_call.1} parent=5 // pred_check_branch
        %273 = sbr.rel (%p271) target = $region44
      $region43: #{tpu_custom_call.1} parent=5 // pred_region
        %s274 = ssub.s32 %s15, 2
        // Predicated region
        $region45: #{tpu_custom_call.1} parent=43 // pred_check
          %p275 = pneg %p91
        $region46: #{tpu_custom_call.1} parent=43 // pred_check_branch
          %277 = sbr.rel (%p275) target = $region48
        $region47: #{tpu_custom_call.1} parent=43 // pred_region
          %s278 = sand.u32 %s76, 1
          %s279 = scalar_lea.sflag [#allocation4], %s278
          %s280 = sand.u32 %s76, 1
          %s281 = smul.addr %s280, 8
          %s282 = scalar_lea.vmem [#allocation7], %s281
          %283 = dma.done %s279, 128
        $region48: #{tpu_custom_call.1} parent=43 // pred_fallthru
          _
      $region44: #{tpu_custom_call.1} parent=5 // pred_fallthru
        _
    $region6: #{tpu_custom_call.1} parent=1 // loop_footer
      %s19 = sadd.s32 1, %s15
    $region7: #{tpu_custom_call.1} parent=1 // loop_footer_branch
      %14 = sbr.rel target = $region3
    $region8: #{tpu_custom_call.1} parent=1 // loop_exit
      _
    %284 = vsyncpa [#allocation3], 1
    %s285 = scalar_lea.sflag [#allocation3], 1
    %286 = vsyncpa %s285, 1
    %287 = vsyncpa [#allocation4], 1
    %s288 = scalar_lea.sflag [#allocation4], 1
    %289 = vsyncpa %s288, 1
    %290 = vsyncpa [#allocation5], 1
    %s291 = scalar_lea.sflag [#allocation5], 1
    %292 = vsyncpa %s291, 1

</llo_original>
